<compile_context>
chip_gen: v6e
topology: v6e:2x2x1
jax: 0.10.0
libtpu: 0.0.40
codegen_flags: <defaults>
</compile_context>

<pallas_src>
import jax
import jax.numpy as jnp
from jax.experimental import pallas as pl
from jax.experimental.pallas import tpu as pltpu


def rl_agent_kernel(x_ref, w1_ref, b1_ref, w2_ref, b2_ref, o_ref):
    # x_ref: (D, TB) batch-on-lanes tile; w1_ref: (H, D) (PyTorch layout);
    # b1_ref: (H, 1); w2_ref: (H, 1); b2_ref: (1,) SMEM scalar; o_ref: (1, TB).
    # Hidden layer on the MXU: (H, D) @ (D, TB); bias + ReLU on full-lane vregs.
    h = jnp.dot(w1_ref[...], x_ref[...], preferred_element_type=jnp.float32)
    h = jnp.maximum(h + b1_ref[...], 0.0)                           # (H, TB)

    # Width-1 output layer: VPU multiply by the (H, 1) weight column + XLU
    # sublane reduction -> lane-dense (1, TB) row; bias from SMEM.
    logits = jnp.sum(h * w2_ref[...], axis=0, keepdims=True) + b2_ref[0]

    # Numerically-stable sigmoid (exp on the EUP).
    o_ref[...] = jax.nn.sigmoid(logits).astype(o_ref.dtype)


def rl_agent_forward(x, w1, b1, w2, b2, *, block_b=16384):
    """x: (B, D) f32; w1: (H, D); b1: (H, 1); w2: (H, 1); b2: (1,) -> (B, 1)."""
    B, D = x.shape
    H = w1.shape[0]

    # Batch tile along the lane axis: multiple of 128, capped at block_b, and
    # no larger than the (rounded-up) batch so small batches use grid=(1,).
    tb = min(block_b, pl.cdiv(B, 128) * 128)
    tb = pl.cdiv(tb, 128) * 128
    Bp = pl.cdiv(B, tb) * tb
    grid = (Bp // tb,)

    # Layout plumbing: present x batch-minor so batch lands on the 128 lanes.
    # Transpose + pad fuse into a single XLA copy feeding the kernel.
    xt = x.T
    if Bp != B:
        xt = jnp.pad(xt, ((0, 0), (0, Bp - B)))

    out = pl.pallas_call(
        rl_agent_kernel,
        out_shape=jax.ShapeDtypeStruct((1, Bp), jnp.float32),
        grid=grid,
        in_specs=[
            pl.BlockSpec((D, tb), lambda i: (0, i)),            # x tile (pipelined)
            pl.BlockSpec((H, D), lambda i: (0, 0)),             # w1 (VMEM-resident)
            pl.BlockSpec((H, 1), lambda i: (0, 0)),             # b1 (VMEM-resident)
            pl.BlockSpec((H, 1), lambda i: (0, 0)),             # w2 col (VMEM-resident)
            pl.BlockSpec(memory_space=pltpu.MemorySpace.SMEM),  # b2 scalar
        ],
        out_specs=pl.BlockSpec((1, tb), lambda i: (0, i)),      # lane-dense output
        compiler_params=pltpu.CompilerParams(
            dimension_semantics=("parallel",),   # shard batch tiles across TCs
            vmem_limit_bytes=32 * 1024 * 1024,   # raises v5e's 16 MiB default
        ),
    )(xt, w1, b1, w2, b2)
    return out[0, :B].reshape(B, 1)


def init_params(key, input_dim, hidden_dim):
    """Mimics nn.Linear uniform(-1/sqrt(fan_in), 1/sqrt(fan_in)) init.
    w1 stored in PyTorch (out, in) layout; w2 stored as an (H, 1) column."""
    k1, k2, k3, k4 = jax.random.split(key, 4)
    bound1 = 1.0 / jnp.sqrt(jnp.float32(input_dim))
    bound2 = 1.0 / jnp.sqrt(jnp.float32(hidden_dim))
    w1 = jax.random.uniform(k1, (hidden_dim, input_dim), jnp.float32, -bound1, bound1)
    b1 = jax.random.uniform(k2, (hidden_dim, 1), jnp.float32, -bound1, bound1)
    w2 = jax.random.uniform(k3, (hidden_dim, 1), jnp.float32, -bound2, bound2)
    b2 = jax.random.uniform(k4, (1,), jnp.float32, -bound2, bound2)
    return w1, b1, w2, b2


if __name__ == "__main__":
    input_dim = 32
    hidden_dim = 32

    key = jax.random.PRNGKey(0)
    kx, kp, kx2 = jax.random.split(key, 3)
    w1, b1, w2, b2 = init_params(kp, input_dim, hidden_dim)

    def ref_fwd(x):
        h = jnp.maximum(x @ w1.T + b1[:, 0], 0.0)
        return jax.nn.sigmoid(h @ w2 + b2)

    # Small batch: single grid step, batch padded 8 -> 128 lanes in the wrapper.
    x_small = jax.random.normal(kx, (8, input_dim), jnp.float32)
    out_small = jax.block_until_ready(rl_agent_forward(x_small, w1, b1, w2, b2))
    assert out_small.shape == (8, 1)
    assert jnp.allclose(out_small, ref_fwd(x_small), atol=1e-5, rtol=1e-5)

    # Larger, non-divisible batch exercising the multi-step batch grid.
    x_big = jax.random.normal(kx2, (600, input_dim), jnp.float32)
    out_big = jax.block_until_ready(
        rl_agent_forward(x_big, w1, b1, w2, b2, block_b=256))
    assert out_big.shape == (600, 1)
    assert jnp.allclose(out_big, ref_fwd(x_big), atol=1e-5, rtol=1e-5)

    print("KERNEL_OK")
</pallas_src>

<mosaic_0001>
module attributes {stable_mosaic.version = 11 : i64} {
  func.func @rl_agent_kernel(%arg0: i32, %arg1: memref<32x128xf32, #tpu.memory_space<vmem>>, %arg2: memref<32x32xf32, #tpu.memory_space<vmem>>, %arg3: memref<32x1xf32, #tpu.memory_space<vmem>>, %arg4: memref<32x1xf32, #tpu.memory_space<vmem>>, %arg5: memref<1xf32, #tpu.memory_space<smem>>, %arg6: memref<1x128xf32, #tpu.memory_space<vmem>>) attributes {dimension_semantics = [#tpu.dimension_semantics<parallel>], iteration_bounds = array<i64: 1>, scalar_prefetch = 0 : i64, scratch_operands = 0 : i64, tpu.core_type = #tpu.core_type<tc>, window_params = [{transform_indices = @transform_0, window_bounds = array<i64: 32, 128>}, {pipeline_mode = #tpu.pipeline_mode<synchronous>, transform_indices = @transform_1, window_bounds = array<i64: 32, 32>}, {pipeline_mode = #tpu.pipeline_mode<synchronous>, transform_indices = @transform_2, window_bounds = array<i64: 32, 1>}, {pipeline_mode = #tpu.pipeline_mode<synchronous>, transform_indices = @transform_3, window_bounds = array<i64: 32, 1>}, {transform_indices = @transform_4, window_bounds = array<i64: 1>}, {transform_indices = @transform_5, window_bounds = array<i64: 1, 128>}]} {
    %c0 = arith.constant 0 : index
    %c0_0 = arith.constant 0 : index
    %0 = vector.load %arg2[%c0, %c0_0] : memref<32x32xf32, #tpu.memory_space<vmem>>, vector<32x32xf32>
    %c0_1 = arith.constant 0 : index
    %c0_2 = arith.constant 0 : index
    %1 = vector.load %arg1[%c0_1, %c0_2] : memref<32x128xf32, #tpu.memory_space<vmem>>, vector<32x128xf32>
    %cst = arith.constant dense<0.000000e+00> : vector<32x128xf32>
    %2 = tpu.matmul %0, %1, %cst {dimension_numbers = #tpu.dot_dimension_numbers<[1], [0], [0], [1], [0, 0, 1, 1], [], []>} : vector<32x32xf32>, vector<32x128xf32>, vector<32x128xf32> -> vector<32x128xf32>
    %c0_3 = arith.constant 0 : index
    %c0_4 = arith.constant 0 : index
    %3 = vector.load %arg3[%c0_3, %c0_4] : memref<32x1xf32, #tpu.memory_space<vmem>>, vector<32x1xf32>
    %4 = vector.broadcast %3 : vector<32x1xf32> to vector<32x128xf32>
    %5 = arith.addf %2, %4 : vector<32x128xf32>
    %cst_5 = arith.constant 0.000000e+00 : f32
    %6 = vector.broadcast %cst_5 : f32 to vector<32x128xf32>
    %7 = arith.maximumf %5, %6 : vector<32x128xf32>
    %c0_6 = arith.constant 0 : index
    %c0_7 = arith.constant 0 : index
    %8 = vector.load %arg4[%c0_6, %c0_7] : memref<32x1xf32, #tpu.memory_space<vmem>>, vector<32x1xf32>
    %9 = vector.broadcast %8 : vector<32x1xf32> to vector<32x128xf32>
    %10 = arith.mulf %7, %9 : vector<32x128xf32>
    %cst_8 = arith.constant dense<0.000000e+00> : vector<128xf32>
    %11 = vector.multi_reduction <add>, %10, %cst_8 [0] : vector<32x128xf32> to vector<128xf32>
    %12 = vector.shape_cast %11 : vector<128xf32> to vector<1x128xf32>
    %c0_9 = arith.constant 0 : index
    %13 = memref.load %arg5[%c0_9] : memref<1xf32, #tpu.memory_space<smem>>
    %14 = vector.broadcast %13 : f32 to vector<1x128xf32>
    %15 = arith.addf %12, %14 : vector<1x128xf32>
    %16 = arith.negf %15 : vector<1x128xf32>
    %17 = math.exp %16 : vector<1x128xf32>
    %cst_10 = arith.constant 1.000000e+00 : f32
    %18 = vector.broadcast %cst_10 : f32 to vector<1x128xf32>
    %19 = arith.addf %18, %17 : vector<1x128xf32>
    %20 = arith.divf %18, %19 : vector<1x128xf32>
    %c0_11 = arith.constant 0 : index
    %c0_12 = arith.constant 0 : index
    %21 = vector.load %arg6[%c0_11, %c0_12] : memref<1x128xf32, #tpu.memory_space<vmem>>, vector<1x128xf32>
    tpu.vector_store %arg6[%c0_11, %c0_12], %20 {strides = array<i32>} : memref<1x128xf32, #tpu.memory_space<vmem>>, vector<1x128xf32>,
    return
  }
  func.func @transform_0(%arg0: i32) -> (i32, i32) {
    %c0_i32 = arith.constant 0 : i32
    %c0_i32_0 = arith.constant 0 : i32
    return %c0_i32, %arg0 : i32, i32
  }
  func.func @transform_1(%arg0: i32) -> (i32, i32) {
    %c0_i32 = arith.constant 0 : i32
    %c0_i32_0 = arith.constant 0 : i32
    %c0_i32_1 = arith.constant 0 : i32
    return %c0_i32, %c0_i32_0 : i32, i32
  }
  func.func @transform_2(%arg0: i32) -> (i32, i32) {
    %c0_i32 = arith.constant 0 : i32
    %c0_i32_0 = arith.constant 0 : i32
    %c0_i32_1 = arith.constant 0 : i32
    return %c0_i32, %c0_i32_0 : i32, i32
  }
  func.func @transform_3(%arg0: i32) -> (i32, i32) {
    %c0_i32 = arith.constant 0 : i32
    %c0_i32_0 = arith.constant 0 : i32
    %c0_i32_1 = arith.constant 0 : i32
    return %c0_i32, %c0_i32_0 : i32, i32
  }
  func.func @transform_4(%arg0: i32) -> i32 {
    %c0_i32 = arith.constant 0 : i32
    %c0_i32_0 = arith.constant 0 : i32
    return %c0_i32 : i32
  }
  func.func @transform_5(%arg0: i32) -> (i32, i32) {
    %c0_i32 = arith.constant 0 : i32
    %c0_i32_0 = arith.constant 0 : i32
    return %c0_i32, %arg0 : i32, i32
  }
}

</mosaic_0001>

<llo_original>
// kernel: tpu_custom_call.1
$region0: #{tpu_custom_call.1}
  #allocation0 [shape = 'u32[]', space=smem, size = 0x4, offset = 0x4, fixed_abs, tag = 'smem constant byte address 0x4 - core index']
  #allocation1 [shape = 'u32[144,128]{1,0:T(1,128)}', space=vmem, size = 0x12000, scoped, tag = 'internal scratch']
  #allocation2 [shape = 'f32[1]{0:T(128)S(6)}', space=smem, size = 0x200, scoped, tag = 'scoped memory for tpu_custom_call.1']
  %s0 = inlined_call_operand.vmem [shape: f32[32,128], index: 0, kind: input, shape index: {}]
  %s1 = inlined_call_operand.vmem [shape: f32[32,32], index: 1, kind: input, shape index: {}]
  %s2 = inlined_call_operand.vmem [shape: f32[32,1], index: 2, kind: input, shape index: {}]
  %s3 = inlined_call_operand.vmem [shape: f32[32,1], index: 3, kind: input, shape index: {}]
  %s4 = inlined_call_operand.<no memory space> [shape: f32[1], index: 4, kind: input, shape index: {}]
  %s5 = inlined_call_operand.hbm [shape: f32[1,128], index: 5, kind: output, shape index: {}]
  %s6 = sld [smem:[#allocation0]]
  $region30: #{tpu_custom_call.1} parent=0
    _
  %s8 = ssub.s32 1, %s6
  %s9 = scalar_select 0, %s8, %s6
  %10 = sst [smem:[#allocation2]] %s4
  $region1: #{tpu_custom_call.1} parent=0
    #allocation3 [shape = 'u8[512]{0}', space=vmem, size = 0x400, scoped, tag = 'output window, operand 0, single buffered']
    #allocation4 [shape = 's32[1]{0}', space=sflag, size = 0x4, scoped, tag = 'scoped memory for tpu_custom_call.1']
    %11 = vsyncpa [#allocation4], 0
    // Predicated region
    $region2: #{tpu_custom_call.1} parent=1 // pred_check
      _
    $region3: #{tpu_custom_call.1} parent=1 // pred_check_branch
      %13 = sbr.rel (0) target = $region5
    $region4: #{tpu_custom_call.1} parent=1 // pred_region
      _
    $region5: #{tpu_custom_call.1} parent=1 // pred_fallthru
      _
    // Predicated region
    $region6: #{tpu_custom_call.1} parent=1 // pred_check
      _
    $region7: #{tpu_custom_call.1} parent=1 // pred_check_branch
      %15 = sbr.rel (0) target = $region9
    $region8: #{tpu_custom_call.1} parent=1 // pred_region
      _
    $region9: #{tpu_custom_call.1} parent=1 // pred_fallthru
      _
    // Predicated region
    $region10: #{tpu_custom_call.1} parent=1 // pred_check
      _
    $region11: #{tpu_custom_call.1} parent=1 // pred_check_branch
      %17 = sbr.rel (0) target = $region13
    $region12: #{tpu_custom_call.1} parent=1 // pred_region
      _
    $region13: #{tpu_custom_call.1} parent=1 // pred_fallthru
      _
    // Predicated region
    $region14: #{tpu_custom_call.1} parent=1 // pred_check
      _
    $region15: #{tpu_custom_call.1} parent=1 // pred_check_branch
      %19 = sbr.rel (0) target = $region17
    $region16: #{tpu_custom_call.1} parent=1 // pred_region
      _
    $region17: #{tpu_custom_call.1} parent=1 // pred_fallthru
      _
    // Predicated region
    $region18: #{tpu_custom_call.1} parent=1 // pred_check
      _
    $region19: #{tpu_custom_call.1} parent=1 // pred_check_branch
      %21 = sbr.rel (0) target = $region21
    $region20: #{tpu_custom_call.1} parent=1 // pred_region
      _
    $region21: #{tpu_custom_call.1} parent=1 // pred_fallthru
      _
    %v22 = vld [vmem:[%s1] sm:$0xff]
    %v23 = vld [vmem:[%s1 + $0x8] sm:$0xff]
    %v24 = vld [vmem:[%s1 + $0x10] sm:$0xff]
    %v25 = vld [vmem:[%s1 + $0x18] sm:$0xff]
    %v26 = vld [vmem:[%s0] sm:$0xff]
    %v27 = vld [vmem:[%s0 + $0x8] sm:$0xff]
    %v28 = vld [vmem:[%s0 + $0x10] sm:$0xff]
    %v29 = vld [vmem:[%s0 + $0x18] sm:$0xff]
    %v30 = vld [vmem:[%s2] sm:$0xff]
    %v31 = vld [vmem:[%s2 + $0x8] sm:$0xff]
    %v32 = vld [vmem:[%s2 + $0x10] sm:$0xff]
    %v33 = vld [vmem:[%s2 + $0x18] sm:$0xff]
    %35 = vset.pattern.permute.xlu0 0
    %36 = vperm.xlu0 %35, %v30
    %v37 = vpop.permute.xlu0 %36
    %40 = vset.pattern.permute.xlu0 0
    %41 = vperm.xlu0 %40, %v31
    %v42 = vpop.permute.xlu0 %41
    %45 = vset.pattern.permute.xlu0 0
    %46 = vperm.xlu0 %45, %v32
    %v47 = vpop.permute.xlu0 %46
    %50 = vset.pattern.permute.xlu0 0
    %51 = vperm.xlu0 %50, %v33
    %v52 = vpop.permute.xlu0 %51
    %vm54 = vcmask 261120
    %v56 = vsel %vm54, %v22, 0
    %v59 = vsel %vm54, %v23, 0
    %v62 = vsel %vm54, %v24, 0
    %v65 = vsel %vm54, %v25, 0
    %67 = vmatprep.subr.mxu0 0.0
    %68 = vmatpush1.msra.mxu0 0.0
    %69 = vmatprep.subr.mxu0 0.0
    %70 = vmatpush1.msra.mxu0 0.0
    %71 = vmatprep.subr.mxu0 0.0
    %72 = vmatpush1.msra.mxu0 0.0
    %73 = vmatprep.subr.mxu0 0.0
    %74 = vmatpush1.msra.mxu0 0.0
    %75 = vmatprep.subr.mxu0 0.0
    %76 = vmatpush1.msra.mxu0 0.0
    %77 = vmatprep.subr.mxu0 0.0
    %78 = vmatpush1.msra.mxu0 0.0
    %79 = vmatprep.subr.mxu0 0.0
    %80 = vmatpush1.msra.mxu0 0.0
    %81 = vmatprep.subr.mxu0 0.0
    %82 = vmatpush1.msra.mxu0 0.0
    %83 = vmatprep.subr.mxu0 0.0
    %84 = vmatpush1.msra.mxu0 0.0
    %85 = vmatprep.subr.mxu0 0.0
    %86 = vmatpush1.msra.mxu0 0.0
    %87 = vmatprep.subr.mxu0 0.0
    %88 = vmatpush1.msra.mxu0 0.0
    %89 = vmatprep.subr.mxu0 0.0
    %90 = vmatpush1.msra.mxu0 0.0
    %91 = vmatprep.subr.mxu0 0.0
    %92 = vmatpush1.msra.mxu0 %v29
    %93 = vmatprep.subr.mxu0 0.0
    %94 = vmatpush1.msra.mxu0 %v28
    %95 = vmatprep.subr.mxu0 0.0
    %96 = vmatpush1.msra.mxu0 %v27
    %97 = vmatprep.subr.mxu0 0.0
    %98 = vmatpush1.msra.mxu0 %v26
    %99 = vmatprep.subr.mxu0 0.0
    %100 = vmatpush2.msra.mxu0 0.0
    %101 = vmatprep.subr.mxu0 0.0
    %102 = vmatpush2.msra.mxu0 0.0
    %103 = vmatprep.subr.mxu0 0.0
    %104 = vmatpush2.msra.mxu0 0.0
    %105 = vmatprep.subr.mxu0 0.0
    %106 = vmatpush2.msra.mxu0 0.0
    %107 = vmatprep.subr.mxu0 0.0
    %108 = vmatpush2.msra.mxu0 0.0
    %109 = vmatprep.subr.mxu0 0.0
    %110 = vmatpush2.msra.mxu0 0.0
    %111 = vmatprep.subr.mxu0 0.0
    %112 = vmatpush2.msra.mxu0 0.0
    %113 = vmatprep.subr.mxu0 0.0
    %114 = vmatpush2.msra.mxu0 0.0
    %115 = vmatprep.subr.mxu0 0.0
    %116 = vmatpush2.msra.mxu0 0.0
    %117 = vmatprep.subr.mxu0 0.0
    %118 = vmatpush2.msra.mxu0 0.0
    %119 = vmatprep.subr.mxu0 0.0
    %120 = vmatpush2.msra.mxu0 0.0
    %121 = vmatprep.subr.mxu0 0.0
    %122 = vmatpush2.msra.mxu0 0.0
    %123 = vmatprep.subr.mxu0 0.0
    %124 = vmatpush2.msra.mxu0 0.0
    %125 = vmatprep.subr.mxu0 0.0
    %126 = vmatpush2.msra.mxu0 0.0
    %127 = vmatprep.subr.mxu0 0.0
    %128 = vmatpush2.msra.mxu0 0.0
    %129 = vmatprep.subr.mxu0 0.0
    %130 = vmatpush2.msra.mxu0 0.0
    %131 = vmatprep.mubr.f32.mxu0 0.0
    %132 = vmatmul.mubr.f32.gmra.mxu0 %v56
    %v133 = vpop.f32.mrf.mxu0
    %v134 = vadd.f32 %v37, %v133
    %v135 = vpop.f32.mrf.mxu0
    %136 = vmatprep.mubr.f32.mxu0 0.0
    %137 = vmatmul.mubr.f32.gmra.mxu0 %v59
    %v138 = vpop.f32.mrf.mxu0
    %v139 = vadd.f32 %v42, %v138
    %v140 = vpop.f32.mrf.mxu0
    %141 = vmatprep.mubr.f32.mxu0 0.0
    %142 = vmatmul.mubr.f32.gmra.mxu0 %v62
    %v143 = vpop.f32.mrf.mxu0
    %v144 = vadd.f32 %v47, %v143
    %v145 = vpop.f32.mrf.mxu0
    %146 = vmatprep.mubr.f32.mxu0 0.0
    %147 = vmatmul.mubr.f32.gmra.mxu0 %v65
    %v148 = vpop.f32.mrf.mxu0
    %v149 = vadd.f32 %v52, %v148
    %v150 = vpop.f32.mrf.mxu0
    %151 = vdwg.mxu0
    %v152 = vmax.f32 %v134, 0.0
    %v153 = vmax.f32 %v139, 0.0
    %v154 = vmax.f32 %v144, 0.0
    %v155 = vmax.f32 %v149, 0.0
    %v156 = vld [vmem:[%s3] sm:$0xff]
    %v157 = vld [vmem:[%s3 + $0x8] sm:$0xff]
    %v158 = vld [vmem:[%s3 + $0x10] sm:$0xff]
    %v159 = vld [vmem:[%s3 + $0x18] sm:$0xff]
    %161 = vset.pattern.permute.xlu0 0
    %162 = vperm.xlu0 %161, %v156
    %v163 = vpop.permute.xlu0 %162
    %166 = vset.pattern.permute.xlu0 0
    %167 = vperm.xlu0 %166, %v157
    %v168 = vpop.permute.xlu0 %167
    %171 = vset.pattern.permute.xlu0 0
    %172 = vperm.xlu0 %171, %v158
    %v173 = vpop.permute.xlu0 %172
    %176 = vset.pattern.permute.xlu0 0
    %177 = vperm.xlu0 %176, %v159
    %v178 = vpop.permute.xlu0 %177
    %v180 = vmul.f32 %v152, %v163
    %v181 = vmul.f32 %v153, %v168
    %v182 = vmul.f32 %v154, %v173
    %v183 = vmul.f32 %v155, %v178
    %v184 = vadd.f32 %v180, %v181
    %v185 = vadd.f32 %v184, %v182
    %v186 = vadd.f32 %v185, %v183
    %v187 = vrot.slane %v186, 4
    %v188 = vadd.f32 %v186, %v187
    %v189 = vrot.slane %v188, 2
    %v190 = vadd.f32 %v188, %v189
    %v191 = vrot.slane %v190, 1
    %v192 = vadd.f32 %v190, %v191
    %s193 = sld [smem:[#allocation2]]
    %v194 = vstv %s193
    %v195 = vadd.f32 %v192, %v194
    %v196 = vxor.u32 %v195, 2147483648
    %v197 = vmul.f32 %v196, 1.442695
    %v198 = vpow.pop %v197
    %v199 = vadd.f32 %v198, 1.0
    %v200 = vrcp.pop %v199
    %v201 = vmul.f32 1.0, %v200
    %202 = vst [vmem:[#allocation3] sm:$0x1] %v201
    // Predicated region
    $region22: #{tpu_custom_call.1} parent=1 // pred_check
      _
    $region23: #{tpu_custom_call.1} parent=1 // pred_check_branch
      %204 = sbr.rel (0) target = $region25
    $region24: #{tpu_custom_call.1} parent=1 // pred_region
      %s206 = ssub.s32 16, 16
      %207 = vsyncadd [#allocation4], %s206
      %s209 = sshll.u32 [#allocation3], 4
      %s210 = int_to_ptr.vmem [resolvable:$true] %s209
      %212 = dma.vmem_to_hbm [thread:$0]  %s210, 16, %s5, [#allocation4]
    $region25: #{tpu_custom_call.1} parent=1 // pred_fallthru
      _
    // Predicated region
    $region26: #{tpu_custom_call.1} parent=1 // pred_check
      _
    $region27: #{tpu_custom_call.1} parent=1 // pred_check_branch
      %214 = sbr.rel (0) target = $region29
    $region28: #{tpu_custom_call.1} parent=1 // pred_region
      %215 = dma.done [#allocation4], 16
    $region29: #{tpu_custom_call.1} parent=1 // pred_fallthru
      _
    %216 = vsyncpa [#allocation4], 1

</llo_original>
